<compile_context>
chip_gen: v7x
topology: tpu7x:2x2x1
jax: 0.10.0
libtpu: 0.0.40
codegen_flags: <defaults>
</compile_context>

<pallas_src>
import math

import jax
import jax.numpy as jnp
from jax.experimental import pallas as pl
from jax.experimental.pallas import tpu as pltpu


def _batch_tile(B, S):
    """Batch elements per grid step.

    Rows of sin work per step = TB * S.  Aim for >= ~512 sublane rows so the
    ~0.35us per-grid-step overhead is amortized; when the batch is tiled, TB is
    kept a multiple of 8 so the (TB, S) / (TB, CN*S) blocks stay sublane-aligned.
    This also bounds the (TB*S, 2M) phase intermediate in VMEM at large 2M.
    """
    target_rows = 512
    tb = max(1, target_rows // max(1, S))
    if tb >= B:
        return B
    return max(8, (tb // 8) * 8)


def fd_embedding_forward(x, params):
    B, S, D = x.shape
    C, N, H = params["channels"], params["n_nodes"], params["heads"]
    CN = C * N
    two_m = 2 * CN * H            # fused sin|cos lane width
    f32 = jnp.float32

    # ---- parameter packing: lane order of the 2M axis is (j, h, c, n) ----
    W = params["phase_w"].astype(f32)      # (C, N, H, 2)
    bph = params["phase_b"].astype(f32)    # (C, N, H, 2)
    w2 = jnp.transpose(W, (3, 2, 0, 1)).reshape(1, two_m)
    shift = jnp.array([0.0, math.pi / 2], f32).reshape(2, 1, 1, 1)  # cos = sin(.+pi/2)
    b2 = (jnp.transpose(bph, (3, 2, 0, 1)) + shift).reshape(1, two_m)
    # fusion_heads weights, broadcast over (c, n): fh_w[j*H+h] at lanes of block (j,h)
    fhw = jnp.repeat(params["fh_w"].astype(f32), CN).reshape(1, two_m)
    wd = params["fd_w"].astype(f32)                                  # (D,)  -> SMEM
    # fused constant bias: fusion_dim(fusion_heads bias)
    bias = jnp.reshape(params["fd_b"] + params["fh_b"] * jnp.sum(wd), (1,)).astype(f32)

    # ---- batch tiling ----
    TB = _batch_tile(B, S)
    B_pad = ((B + TB - 1) // TB) * TB
    NB = B_pad // TB

    # x: (B, S, D) -> (D, B_pad, S).  x is tiny relative to the (rows, 2M) sin
    # work and the output, so this wrapper-side relayout is negligible.
    x_t = jnp.transpose(x.astype(f32), (2, 0, 1))
    if B_pad != B:
        x_t = jnp.pad(x_t, ((0, 0), (0, B_pad - B), (0, 0)))

    def kernel(x_ref, w2_ref, b2_ref, fhw_ref, wd_ref, bias_ref, out_ref, acc_ref):
        # x_ref   : (TB, S)        current batch tile, date-feature d of this step
        # w2/b2   : (1, 2M)        fused phase weights / biases (cos bias += pi/2)
        # fhw_ref : (1, 2M)        fusion_heads weights tiled over (c, n)
        # wd_ref  : (D,)   SMEM    fusion_dim weights
        # bias_ref: (1,)   SMEM    fused scalar bias
        # out_ref : (TB, CN*S)     flat (c, n, s) lane-dense output rows
        # acc_ref : (TB, S, CN)    VMEM accumulator over the D grid axis
        d = pl.program_id(1)

        @pl.when(d == 0)
        def _init():
            acc_ref[...] = jnp.zeros_like(acc_ref)

        # lane-broadcast x against the 2M-wide weights: one lane-dense block
        x3 = x_ref[...][:, :, None]                         # (TB, S, 1)
        phase = x3 * w2_ref[...] + b2_ref[...]              # (TB, S, 2M)  VPU
        vw = jnp.sin(phase) * fhw_ref[...]                  # (TB, S, 2M)  EUP + VPU

        # Head reduction: lane axis ordered (j, h, c, n), so each (j, h) term
        # is a contiguous CN-wide lane slice -> 2H adds, no (2M, CN) block-diag
        # operand (which would grow as (C*N)^2 * H and blow VMEM on v7x).
        y1 = vw[:, :, 0:CN]
        for k in range(1, 2 * H):
            y1 = y1 + vw[:, :, k * CN:(k + 1) * CN]         # (TB, S, CN)

        # Date reduction: accumulate the wd[d]-weighted partial over the
        # "arbitrary" D grid axis (replaces the old (S, S*D) block-diag matmul).
        acc_ref[...] += wd_ref[d] * y1

        @pl.when(d == pl.num_programs(1) - 1)
        def _finalize():
            y = acc_ref[...] + bias_ref[0]                  # (TB, S, CN)
            y = jnp.swapaxes(y, 1, 2)                       # (TB, CN, S)  XLU
            out_ref[...] = y.reshape(TB, CN * S).astype(out_ref.dtype)

    out = pl.pallas_call(
        kernel,
        out_shape=jax.ShapeDtypeStruct((B_pad, CN * S), f32),
        grid=(NB, D),                                       # D (reduction) last
        in_specs=[
            pl.BlockSpec((None, TB, S), lambda b, d: (d, b, 0)),   # x_t
            pl.BlockSpec((1, two_m), lambda b, d: (0, 0)),         # w2 (resident)
            pl.BlockSpec((1, two_m), lambda b, d: (0, 0)),         # b2
            pl.BlockSpec((1, two_m), lambda b, d: (0, 0)),         # fhw
            pl.BlockSpec(memory_space=pltpu.MemorySpace.SMEM),     # wd
            pl.BlockSpec(memory_space=pltpu.MemorySpace.SMEM),     # bias
        ],
        out_specs=pl.BlockSpec((TB, CN * S), lambda b, d: (b, 0)),
        scratch_shapes=[pltpu.VMEM((TB, S, CN), f32)],
        compiler_params=pltpu.CompilerParams(
            dimension_semantics=("parallel", "arbitrary")),
    )(x_t, w2, b2, fhw, wd, bias)

    # (B, CN*S) in (c, n, s) order -> (B, C, N, S): pure reshape, no transpose.
    return out[:B].reshape(B, C, N, S)


def fd_embedding_ref(x, params):
    """Pure-JAX reference mirroring the PyTorch forward exactly."""
    B, S, D = x.shape
    C, N, H = params["channels"], params["n_nodes"], params["heads"]
    w = params["phase_w"].reshape(-1)      # (2*C*N*H,) in (c, n, h, j) order
    b = params["phase_b"].reshape(-1)
    phases = x[..., None] * w + b                                   # (B,S,D,2CNH)
    phases = phases.reshape(B, S, D, C, N, H, 2).transpose(0, 3, 4, 1, 2, 5, 6)
    v_sin = jnp.sin(phases[..., 0])
    v_cos = jnp.cos(phases[..., 1])
    values = jnp.concatenate([v_sin, v_cos], axis=-1)               # (B,C,N,S,D,2H)
    y = jnp.einsum("bcnsdk,k->bcnsd", values, params["fh_w"]) + params["fh_b"]
    y = jnp.einsum("bcnsd,d->bcns", y, params["fd_w"]) + params["fd_b"]
    return y


def init_params(key, channels, c_date, n_nodes, embed_period, heads=8, sigma=1.0):
    """Deterministic synthetic parameter init mirroring projection_init()."""
    k1, k2, k3, k4, k5, k6 = jax.random.split(key, 6)
    period = list(embed_period)[:heads]
    if len(period) < heads:
        period = period + [1 for _ in range(heads - len(period))]
    period = jnp.asarray(period, jnp.float32).reshape(1, 1, heads, 1)

    phase_w = 2.0 * math.pi * period + sigma * jax.random.normal(
        k1, (channels, n_nodes, heads, 2), jnp.float32)
    phase_b = 2.0 * math.pi * jax.random.uniform(
        k2, (channels, n_nodes, heads, 2), jnp.float32)

    bnd_h = 1.0 / math.sqrt(2 * heads)
    fh_w = jax.random.uniform(k3, (2 * heads,), jnp.float32, -bnd_h, bnd_h)
    fh_b = jax.random.uniform(k4, (), jnp.float32, -bnd_h, bnd_h)

    bnd_d = 1.0 / math.sqrt(c_date)
    fd_w = jax.random.uniform(k5, (c_date,), jnp.float32, -bnd_d, bnd_d)
    fd_b = jax.random.uniform(k6, (), jnp.float32, -bnd_d, bnd_d)

    return {
        "channels": channels, "n_nodes": n_nodes, "heads": heads,
        "phase_w": phase_w, "phase_b": phase_b,
        "fh_w": fh_w, "fh_b": fh_b,
        "fd_w": fd_w, "fd_b": fd_b,
    }


if __name__ == "__main__":
    # Small, module-consistent shapes (2M = 2*C*N*H = 128 lanes exactly).
    B, S = 2, 8
    channels, c_date, n_nodes, heads = 2, 4, 4, 8
    embed_period = [24, 12, 7, 3]       # padded with 1s up to `heads`
    sigma = 1.0

    key = jax.random.PRNGKey(0)
    kp, kx = jax.random.split(key)
    params = init_params(kp, channels, c_date, n_nodes, embed_period, heads, sigma)
    x = jax.random.uniform(kx, (B, S, c_date), jnp.float32)   # MinMax-scaled input

    y = fd_embedding_forward(x, params)
    y = jax.block_until_ready(y)

    y_ref = fd_embedding_ref(x, params)
    assert y.shape == (B, channels, n_nodes, S), y.shape
    assert jnp.allclose(y, y_ref, atol=2e-3, rtol=2e-3), float(jnp.max(jnp.abs(y - y_ref)))

    print("KERNEL_OK")
</pallas_src>

<mosaic_0001>
module attributes {stable_mosaic.version = 11 : i64} {
  func.func @kernel(%arg0: i32, %arg1: i32, %arg2: memref<1x2x8xf32, #tpu.memory_space<vmem>>, %arg3: memref<1x128xf32, #tpu.memory_space<vmem>>, %arg4: memref<1x128xf32, #tpu.memory_space<vmem>>, %arg5: memref<1x128xf32, #tpu.memory_space<vmem>>, %arg6: memref<4xf32, #tpu.memory_space<smem>>, %arg7: memref<1xf32, #tpu.memory_space<smem>>, %arg8: memref<2x64xf32, #tpu.memory_space<vmem>>, %arg9: memref<2x8x8xf32, #tpu.memory_space<vmem>>) attributes {dimension_semantics = [#tpu.dimension_semantics<parallel>, #tpu.dimension_semantics<arbitrary>], iteration_bounds = array<i64: 1, 4>, scalar_prefetch = 0 : i64, scratch_operands = 1 : i64, tpu.core_type = #tpu.core_type<tc>, window_params = [{transform_indices = @transform_0, window_bounds = array<i64: 1, 2, 8>}, {pipeline_mode = #tpu.pipeline_mode<synchronous>, transform_indices = @transform_1, window_bounds = array<i64: 1, 128>}, {pipeline_mode = #tpu.pipeline_mode<synchronous>, transform_indices = @transform_2, window_bounds = array<i64: 1, 128>}, {pipeline_mode = #tpu.pipeline_mode<synchronous>, transform_indices = @transform_3, window_bounds = array<i64: 1, 128>}, {transform_indices = @transform_4, window_bounds = array<i64: 4>}, {transform_indices = @transform_5, window_bounds = array<i64: 1>}, {transform_indices = @transform_6, window_bounds = array<i64: 2, 64>}]} {
    %c0_i32 = arith.constant 0 : i32
    %0 = arith.cmpi eq, %arg1, %c0_i32 : i32
    %1 = arith.extui %0 : i1 to i32
    %c0_i32_0 = arith.constant 0 : i32
    %2 = arith.cmpi ne, %1, %c0_i32_0 : i32
    scf.if %2 {
      %cst = arith.constant 0.000000e+00 : f32
      %61 = vector.broadcast %cst : f32 to vector<2x8x8xf32>
      %c0_16 = arith.constant 0 : index
      %c0_17 = arith.constant 0 : index
      %c0_18 = arith.constant 0 : index
      %62 = vector.load %arg9[%c0_16, %c0_17, %c0_18] : memref<2x8x8xf32, #tpu.memory_space<vmem>>, vector<2x8x8xf32>
      tpu.vector_store %arg9[%c0_16, %c0_17, %c0_18], %61 {strides = array<i32>} : memref<2x8x8xf32, #tpu.memory_space<vmem>>, vector<2x8x8xf32>,
    } else {
    }
    %c0 = arith.constant 0 : index
    %c0_1 = arith.constant 0 : index
    %c0_2 = arith.constant 0 : index
    %3 = vector.load %arg2[%c0, %c0_1, %c0_2] : memref<1x2x8xf32, #tpu.memory_space<vmem>>, vector<1x2x8xf32>
    %4 = vector.shape_cast %3 : vector<1x2x8xf32> to vector<2x8xf32>
    %5 = vector.shape_cast %4 : vector<2x8xf32> to vector<2x8x1xf32>
    %c0_3 = arith.constant 0 : index
    %c0_4 = arith.constant 0 : index
    %6 = vector.load %arg3[%c0_3, %c0_4] : memref<1x128xf32, #tpu.memory_space<vmem>>, vector<1x128xf32>
    %7 = vector.shape_cast %6 : vector<1x128xf32> to vector<1x1x128xf32>
    %8 = vector.broadcast %5 : vector<2x8x1xf32> to vector<2x8x128xf32>
    %9 = vector.broadcast %7 : vector<1x1x128xf32> to vector<2x8x128xf32>
    %10 = arith.mulf %8, %9 : vector<2x8x128xf32>
    %c0_5 = arith.constant 0 : index
    %c0_6 = arith.constant 0 : index
    %11 = vector.load %arg4[%c0_5, %c0_6] : memref<1x128xf32, #tpu.memory_space<vmem>>, vector<1x128xf32>
    %12 = vector.shape_cast %11 : vector<1x128xf32> to vector<1x1x128xf32>
    %13 = vector.broadcast %12 : vector<1x1x128xf32> to vector<2x8x128xf32>
    %14 = arith.addf %10, %13 : vector<2x8x128xf32>
    %15 = math.sin %14 : vector<2x8x128xf32>
    %c0_7 = arith.constant 0 : index
    %c0_8 = arith.constant 0 : index
    %16 = vector.load %arg5[%c0_7, %c0_8] : memref<1x128xf32, #tpu.memory_space<vmem>>, vector<1x128xf32>
    %17 = vector.shape_cast %16 : vector<1x128xf32> to vector<1x1x128xf32>
    %18 = vector.broadcast %17 : vector<1x1x128xf32> to vector<2x8x128xf32>
    %19 = arith.mulf %15, %18 : vector<2x8x128xf32>
    %20 = vector.extract_strided_slice %19 {offsets = [0, 0, 0], sizes = [2, 8, 8], strides = [1, 1, 1]} : vector<2x8x128xf32> to vector<2x8x8xf32>
    %21 = vector.extract_strided_slice %19 {offsets = [0, 0, 8], sizes = [2, 8, 8], strides = [1, 1, 1]} : vector<2x8x128xf32> to vector<2x8x8xf32>
    %22 = arith.addf %20, %21 : vector<2x8x8xf32>
    %23 = vector.extract_strided_slice %19 {offsets = [0, 0, 16], sizes = [2, 8, 8], strides = [1, 1, 1]} : vector<2x8x128xf32> to vector<2x8x8xf32>
    %24 = arith.addf %22, %23 : vector<2x8x8xf32>
    %25 = vector.extract_strided_slice %19 {offsets = [0, 0, 24], sizes = [2, 8, 8], strides = [1, 1, 1]} : vector<2x8x128xf32> to vector<2x8x8xf32>
    %26 = arith.addf %24, %25 : vector<2x8x8xf32>
    %27 = vector.extract_strided_slice %19 {offsets = [0, 0, 32], sizes = [2, 8, 8], strides = [1, 1, 1]} : vector<2x8x128xf32> to vector<2x8x8xf32>
    %28 = arith.addf %26, %27 : vector<2x8x8xf32>
    %29 = vector.extract_strided_slice %19 {offsets = [0, 0, 40], sizes = [2, 8, 8], strides = [1, 1, 1]} : vector<2x8x128xf32> to vector<2x8x8xf32>
    %30 = arith.addf %28, %29 : vector<2x8x8xf32>
    %31 = vector.extract_strided_slice %19 {offsets = [0, 0, 48], sizes = [2, 8, 8], strides = [1, 1, 1]} : vector<2x8x128xf32> to vector<2x8x8xf32>
    %32 = arith.addf %30, %31 : vector<2x8x8xf32>
    %33 = vector.extract_strided_slice %19 {offsets = [0, 0, 56], sizes = [2, 8, 8], strides = [1, 1, 1]} : vector<2x8x128xf32> to vector<2x8x8xf32>
    %34 = arith.addf %32, %33 : vector<2x8x8xf32>
    %35 = vector.extract_strided_slice %19 {offsets = [0, 0, 64], sizes = [2, 8, 8], strides = [1, 1, 1]} : vector<2x8x128xf32> to vector<2x8x8xf32>
    %36 = arith.addf %34, %35 : vector<2x8x8xf32>
    %37 = vector.extract_strided_slice %19 {offsets = [0, 0, 72], sizes = [2, 8, 8], strides = [1, 1, 1]} : vector<2x8x128xf32> to vector<2x8x8xf32>
    %38 = arith.addf %36, %37 : vector<2x8x8xf32>
    %39 = vector.extract_strided_slice %19 {offsets = [0, 0, 80], sizes = [2, 8, 8], strides = [1, 1, 1]} : vector<2x8x128xf32> to vector<2x8x8xf32>
    %40 = arith.addf %38, %39 : vector<2x8x8xf32>
    %41 = vector.extract_strided_slice %19 {offsets = [0, 0, 88], sizes = [2, 8, 8], strides = [1, 1, 1]} : vector<2x8x128xf32> to vector<2x8x8xf32>
    %42 = arith.addf %40, %41 : vector<2x8x8xf32>
    %43 = vector.extract_strided_slice %19 {offsets = [0, 0, 96], sizes = [2, 8, 8], strides = [1, 1, 1]} : vector<2x8x128xf32> to vector<2x8x8xf32>
    %44 = arith.addf %42, %43 : vector<2x8x8xf32>
    %45 = vector.extract_strided_slice %19 {offsets = [0, 0, 104], sizes = [2, 8, 8], strides = [1, 1, 1]} : vector<2x8x128xf32> to vector<2x8x8xf32>
    %46 = arith.addf %44, %45 : vector<2x8x8xf32>
    %47 = vector.extract_strided_slice %19 {offsets = [0, 0, 112], sizes = [2, 8, 8], strides = [1, 1, 1]} : vector<2x8x128xf32> to vector<2x8x8xf32>
    %48 = arith.addf %46, %47 : vector<2x8x8xf32>
    %49 = vector.extract_strided_slice %19 {offsets = [0, 0, 120], sizes = [2, 8, 8], strides = [1, 1, 1]} : vector<2x8x128xf32> to vector<2x8x8xf32>
    %50 = arith.addf %48, %49 : vector<2x8x8xf32>
    %c0_9 = arith.constant 0 : index
    %c0_10 = arith.constant 0 : index
    %c0_11 = arith.constant 0 : index
    %51 = vector.load %arg9[%c0_9, %c0_10, %c0_11] : memref<2x8x8xf32, #tpu.memory_space<vmem>>, vector<2x8x8xf32>
    %52 = arith.index_cast %arg1 : i32 to index
    %53 = memref.load %arg6[%52] : memref<4xf32, #tpu.memory_space<smem>>
    %54 = vector.broadcast %53 : f32 to vector<2x8x8xf32>
    %55 = arith.mulf %54, %50 : vector<2x8x8xf32>
    %56 = arith.addf %51, %55 : vector<2x8x8xf32>
    %c0_12 = arith.constant 0 : index
    %c0_13 = arith.constant 0 : index
    %c0_14 = arith.constant 0 : index
    %57 = vector.load %arg9[%c0_12, %c0_13, %c0_14] : memref<2x8x8xf32, #tpu.memory_space<vmem>>, vector<2x8x8xf32>
    tpu.vector_store %arg9[%c0_12, %c0_13, %c0_14], %56 {strides = array<i32>} : memref<2x8x8xf32, #tpu.memory_space<vmem>>, vector<2x8x8xf32>,
    %c3_i32 = arith.constant 3 : i32
    %58 = arith.cmpi eq, %arg1, %c3_i32 : i32
    %59 = arith.extui %58 : i1 to i32
    %c0_i32_15 = arith.constant 0 : i32
    %60 = arith.cmpi ne, %59, %c0_i32_15 : i32
    scf.if %60 {
      %c0_16 = arith.constant 0 : index
      %c0_17 = arith.constant 0 : index
      %c0_18 = arith.constant 0 : index
      %61 = vector.load %arg9[%c0_16, %c0_17, %c0_18] : memref<2x8x8xf32, #tpu.memory_space<vmem>>, vector<2x8x8xf32>
      %c0_19 = arith.constant 0 : index
      %62 = memref.load %arg7[%c0_19] : memref<1xf32, #tpu.memory_space<smem>>
      %63 = vector.broadcast %62 : f32 to vector<2x8x8xf32>
      %64 = arith.addf %61, %63 : vector<2x8x8xf32>
      %65 = tpu.transpose %64, [0, 2, 1] : vector<2x8x8xf32> -> vector<2x8x8xf32>
      %66 = vector.shape_cast %65 : vector<2x8x8xf32> to vector<2x64xf32>
      %c0_20 = arith.constant 0 : index
      %c0_21 = arith.constant 0 : index
      %67 = vector.load %arg8[%c0_20, %c0_21] : memref<2x64xf32, #tpu.memory_space<vmem>>, vector<2x64xf32>
      tpu.vector_store %arg8[%c0_20, %c0_21], %66 {strides = array<i32>} : memref<2x64xf32, #tpu.memory_space<vmem>>, vector<2x64xf32>,
    } else {
    }
    return
  }
  func.func @transform_0(%arg0: i32, %arg1: i32) -> (i32, i32, i32) {
    %c0_i32 = arith.constant 0 : i32
    %c0_i32_0 = arith.constant 0 : i32
    return %arg1, %arg0, %c0_i32 : i32, i32, i32
  }
  func.func @transform_1(%arg0: i32, %arg1: i32) -> (i32, i32) {
    %c0_i32 = arith.constant 0 : i32
    %c0_i32_0 = arith.constant 0 : i32
    %c0_i32_1 = arith.constant 0 : i32
    return %c0_i32, %c0_i32_0 : i32, i32
  }
  func.func @transform_2(%arg0: i32, %arg1: i32) -> (i32, i32) {
    %c0_i32 = arith.constant 0 : i32
    %c0_i32_0 = arith.constant 0 : i32
    %c0_i32_1 = arith.constant 0 : i32
    return %c0_i32, %c0_i32_0 : i32, i32
  }
  func.func @transform_3(%arg0: i32, %arg1: i32) -> (i32, i32) {
    %c0_i32 = arith.constant 0 : i32
    %c0_i32_0 = arith.constant 0 : i32
    %c0_i32_1 = arith.constant 0 : i32
    return %c0_i32, %c0_i32_0 : i32, i32
  }
  func.func @transform_4(%arg0: i32, %arg1: i32) -> i32 {
    %c0_i32 = arith.constant 0 : i32
    %c0_i32_0 = arith.constant 0 : i32
    return %c0_i32 : i32
  }
  func.func @transform_5(%arg0: i32, %arg1: i32) -> i32 {
    %c0_i32 = arith.constant 0 : i32
    %c0_i32_0 = arith.constant 0 : i32
    return %c0_i32 : i32
  }
  func.func @transform_6(%arg0: i32, %arg1: i32) -> (i32, i32) {
    %c0_i32 = arith.constant 0 : i32
    %c0_i32_0 = arith.constant 0 : i32
    return %arg0, %c0_i32 : i32, i32
  }
}

</mosaic_0001>

<llo_original>
// kernel: tpu_custom_call.1
$region0: #{tpu_custom_call.1}
  #allocation0 [shape = 'u32[]', space=smem, size = 0x4, offset = 0x4, fixed_abs, tag = 'smem constant byte address 0x4 - core index']
  #allocation1 [shape = 'u32[144,128]{1,0:T(1,128)}', space=vmem, size = 0x12000, scoped, tag = 'internal scratch']
  #allocation2 [shape = 'f32[2,8,8]{2,1,0:T(8,128)}', space=vmem, size = 0x2000, scoped, tag = 'scratch operand']
  #allocation3 [shape = 'f32[1]{0:T(128)S(6)}', space=smem, size = 0x200, scoped, tag = 'scoped memory for tpu_custom_call.1']
  %s0 = inlined_call_operand.hbm [shape: f32[4,2,8], index: 0, kind: input, shape index: {}]
  %s1 = inlined_call_operand.vmem [shape: f32[1,128], index: 1, kind: input, shape index: {}]
  %s2 = inlined_call_operand.vmem [shape: f32[1,128], index: 2, kind: input, shape index: {}]
  %s3 = inlined_call_operand.vmem [shape: f32[1,128], index: 3, kind: input, shape index: {}]
  %s4 = inlined_call_operand.vmem [shape: f32[4], index: 4, kind: input, shape index: {}]
  %s5 = inlined_call_operand.<no memory space> [shape: f32[1], index: 5, kind: input, shape index: {}]
  %s6 = inlined_call_operand.hbm [shape: f32[2,64], index: 6, kind: output, shape index: {}]
  %s7 = sld [smem:[#allocation0]]
  $region73: #{tpu_custom_call.1} parent=0
    _
  %s9 = ssub.s32 1, %s7
  %s10 = scalar_select 0, %s9, %s7
  %11 = sst [smem:[#allocation3]] %s5
  $region1: #{tpu_custom_call.1} parent=0
    #allocation4 [shape = 'u8[2048]{0}', space=vmem, size = 0x800, scoped, tag = 'input window, operand 0']
    #allocation5 [shape = 's32[2]{0}', space=sflag, size = 0x8, scoped, tag = 'scoped memory for tpu_custom_call.1']
    #allocation6 [shape = 's32[2]{0}', space=sflag, size = 0x8, scoped, tag = 'scoped memory for tpu_custom_call.1']
    #allocation7 [shape = 's32[2]{0}', space=sflag, size = 0x8, scoped, tag = 'scoped memory for tpu_custom_call.1']
    #allocation8 [shape = 'u8[512]{0}', space=smem, size = 0x200, scoped, tag = 'input window, operand 4, single buffered']
    #allocation9 [shape = 'u8[1024]{0}', space=vmem, size = 0x400, scoped, tag = 'output window, operand 0, single buffered']
    %12 = vsyncpa [#allocation5], 0
    %s13 = scalar_lea.sflag [#allocation5], 1
    %14 = vsyncpa %s13, 0
    %15 = vsyncpa [#allocation7], 0
    %16 = vsyncpa [#allocation6], 0
    loop: start=0, step=1, limit=6
    $region2: #{tpu_custom_call.1} parent=1 // loop_pre_header
      _
    $region3: #{tpu_custom_call.1} parent=1 // loop_header
      %s18 = sphi 0, %s22
      %p19 = scmp.ge.s32.totalorder %s18, 6
      %s25 = sphi 0, %s37
      %s26 = sphi 0, %s33
      %s27 = sphi 0, %s25
      %s28 = sphi 0, %s26
      %s29 = sphi 0, %s27
      %s30 = sphi 0, %s28
      %s42 = sphi 0, %s44
      %s45 = sphi 0, %s42
      %s46 = sphi 0, %s45
      %s62 = sphi 0, %s46
      %s66 = sphi 0, %s66
      %s68 = sphi 0, %s66
      %s69 = sphi 0, %s68
      %s83 = sphi 0, %s69
      %s87 = sphi 0, %s87
      %s89 = sphi 0, %s87
      %s90 = sphi 0, %s89
      %s104 = sphi 0, %s90
      %s108 = sphi 0, %s108
      %s110 = sphi 0, %s108
      %s111 = sphi 0, %s110
      %s125 = sphi 0, %s111
      %s129 = sphi 0, %s129
      %s131 = sphi 0, %s129
      %s132 = sphi 0, %s131
      %s146 = sphi 0, %s132
      %s150 = sphi 0, %s150
      %s152 = sphi 0, %s150
      %s153 = sphi 0, %s152
      %s167 = sphi 0, %s153
      %s173 = sphi 0, %s175
      %s176 = sphi 0, %s173
      %s177 = sphi 0, %s176
      %s193 = sphi 0, %s177
    $region4: #{tpu_custom_call.1} parent=1 // loop_header_branch
      %21 = sbr.rel (%p19) target = $region8
    $region5: #{tpu_custom_call.1} parent=1 // loop_body
      %s23 = ssub.s32 %s18, 1
      %s24 = ssub.s32 %s18, 2
      %s31 = sadd.s32 1, %s26
      %p32 = scmp.ge.s32.totalorder %s31, 4
      %s33 = scalar_select %p32, 0, %s31
      %s34 = sadd.s32 1, %s25
      %s35 = scalar_select %p32, %s34, %s25
      %p36 = scmp.ge.s32.totalorder %s35, 1
      %s37 = scalar_select %p36, 0, %s35
      %s38 = ssub.s32 %s26, %s33
      %s39 = ssub.s32 %s25, %s37
      %s40 = sor.u32 %s38, %s39
      %p41 = scmp.eq.s32.totalorder %s40, 0
      %s43 = sadd.s32 %s42, 1
      %s44 = scalar_select %p41, %s42, %s43
      %p47 = pneg %p41
      %p48 = scmp.eq.s32.totalorder %s18, 3
      %p49 = por %p47, %p48
      %p50 = scmp.ne.s32.totalorder %s42, %s45
      %p51 = scmp.eq.s32.totalorder %s18, 0
      %p52 = por %p50, %p51
      %p53 = scmp.ne.s32.totalorder %s42, %s45
      %p54 = scmp.eq.s32.totalorder %s23, 3
      %p55 = por %p53, %p54
      %p56 = scmp.ne.s32.totalorder %s45, %s46
      %p57 = scmp.eq.s32.totalorder %s23, 0
      %p58 = por %p56, %p57
      %p59 = scmp.ne.s32.totalorder %s45, %s46
      %p60 = scmp.eq.s32.totalorder %s24, 3
      %p61 = por %p59, %p60
      %p63 = scmp.ne.s32.totalorder %s46, %s62
      %p64 = scmp.eq.s32.totalorder %s24, 0
      %p65 = por %p63, %p64
      %s67 = sadd.s32 %s66, 1
      %p70 = scmp.eq.s32.totalorder %s18, 3
      %p71 = scmp.ne.s32.totalorder %s66, %s68
      %p72 = scmp.eq.s32.totalorder %s18, 0
      %p73 = por %p71, %p72
      %p74 = scmp.ne.s32.totalorder %s66, %s68
      %p75 = scmp.eq.s32.totalorder %s23, 3
      %p76 = por %p74, %p75
      %p77 = scmp.ne.s32.totalorder %s68, %s69
      %p78 = scmp.eq.s32.totalorder %s23, 0
      %p79 = por %p77, %p78
      %p80 = scmp.ne.s32.totalorder %s68, %s69
      %p81 = scmp.eq.s32.totalorder %s24, 3
      %p82 = por %p80, %p81
      %p84 = scmp.ne.s32.totalorder %s69, %s83
      %p85 = scmp.eq.s32.totalorder %s24, 0
      %p86 = por %p84, %p85
      %s88 = sadd.s32 %s87, 1
      %p91 = scmp.eq.s32.totalorder %s18, 3
      %p92 = scmp.ne.s32.totalorder %s87, %s89
      %p93 = scmp.eq.s32.totalorder %s18, 0
      %p94 = por %p92, %p93
      %p95 = scmp.ne.s32.totalorder %s87, %s89
      %p96 = scmp.eq.s32.totalorder %s23, 3
      %p97 = por %p95, %p96
      %p98 = scmp.ne.s32.totalorder %s89, %s90
      %p99 = scmp.eq.s32.totalorder %s23, 0
      %p100 = por %p98, %p99
      %p101 = scmp.ne.s32.totalorder %s89, %s90
      %p102 = scmp.eq.s32.totalorder %s24, 3
      %p103 = por %p101, %p102
      %p105 = scmp.ne.s32.totalorder %s90, %s104
      %p106 = scmp.eq.s32.totalorder %s24, 0
      %p107 = por %p105, %p106
      %s109 = sadd.s32 %s108, 1
      %p112 = scmp.eq.s32.totalorder %s18, 3
      %p113 = scmp.ne.s32.totalorder %s108, %s110
      %p114 = scmp.eq.s32.totalorder %s18, 0
      %p115 = por %p113, %p114
      %p116 = scmp.ne.s32.totalorder %s108, %s110
      %p117 = scmp.eq.s32.totalorder %s23, 3
      %p118 = por %p116, %p117
      %p119 = scmp.ne.s32.totalorder %s110, %s111
      %p120 = scmp.eq.s32.totalorder %s23, 0
      %p121 = por %p119, %p120
      %p122 = scmp.ne.s32.totalorder %s110, %s111
      %p123 = scmp.eq.s32.totalorder %s24, 3
      %p124 = por %p122, %p123
      %p126 = scmp.ne.s32.totalorder %s111, %s125
      %p127 = scmp.eq.s32.totalorder %s24, 0
      %p128 = por %p126, %p127
      %s130 = sadd.s32 %s129, 1
      %p133 = scmp.eq.s32.totalorder %s18, 3
      %p134 = scmp.ne.s32.totalorder %s129, %s131
      %p135 = scmp.eq.s32.totalorder %s18, 0
      %p136 = por %p134, %p135
      %p137 = scmp.ne.s32.totalorder %s129, %s131
      %p138 = scmp.eq.s32.totalorder %s23, 3
      %p139 = por %p137, %p138
      %p140 = scmp.ne.s32.totalorder %s131, %s132
      %p141 = scmp.eq.s32.totalorder %s23, 0
      %p142 = por %p140, %p141
      %p143 = scmp.ne.s32.totalorder %s131, %s132
      %p144 = scmp.eq.s32.totalorder %s24, 3
      %p145 = por %p143, %p144
      %p147 = scmp.ne.s32.totalorder %s132, %s146
      %p148 = scmp.eq.s32.totalorder %s24, 0
      %p149 = por %p147, %p148
      %s151 = sadd.s32 %s150, 1
      %p154 = scmp.eq.s32.totalorder %s18, 3
      %p155 = scmp.ne.s32.totalorder %s150, %s152
      %p156 = scmp.eq.s32.totalorder %s18, 0
      %p157 = por %p155, %p156
      %p158 = scmp.ne.s32.totalorder %s150, %s152
      %p159 = scmp.eq.s32.totalorder %s23, 3
      %p160 = por %p158, %p159
      %p161 = scmp.ne.s32.totalorder %s152, %s153
      %p162 = scmp.eq.s32.totalorder %s23, 0
      %p163 = por %p161, %p162
      %p164 = scmp.ne.s32.totalorder %s152, %s153
      %p165 = scmp.eq.s32.totalorder %s24, 3
      %p166 = por %p164, %p165
      %p168 = scmp.ne.s32.totalorder %s153, %s167
      %p169 = scmp.eq.s32.totalorder %s24, 0
      %p170 = por %p168, %p169
      %s171 = ssub.s32 %s25, %s37
      %p172 = scmp.eq.s32.totalorder %s171, 0
      %s174 = sadd.s32 %s173, 1
      %s175 = scalar_select %p172, %s173, %s174
      %p178 = pneg %p172
      %p179 = scmp.eq.s32.totalorder %s18, 3
      %p180 = por %p178, %p179
      %p181 = scmp.ne.s32.totalorder %s173, %s176
      %p182 = scmp.eq.s32.totalorder %s18, 0
      %p183 = por %p181, %p182
      %p184 = scmp.ne.s32.totalorder %s173, %s176
      %p185 = scmp.eq.s32.totalorder %s23, 3
      %p186 = por %p184, %p185
      %p187 = scmp.ne.s32.totalorder %s176, %s177
      %p188 = scmp.eq.s32.totalorder %s23, 0
      %p189 = por %p187, %p188
      %p190 = scmp.ne.s32.totalorder %s176, %s177
      %p191 = scmp.eq.s32.totalorder %s24, 3
      %p192 = por %p190, %p191
      %p194 = scmp.ne.s32.totalorder %s177, %s193
      %p195 = scmp.eq.s32.totalorder %s24, 0
      %p196 = por %p194, %p195
      %p197 = scmp.le.s32.totalorder 1, %s18
      %p198 = scmp.lt.s32.totalorder %s18, 5
      %p199 = pnand %p197, %p198
      %p200 = pneg %p199
      // Predicated region
      $region9: #{tpu_custom_call.1} parent=5 // pred_check
        _
      $region10: #{tpu_custom_call.1} parent=5 // pred_check_branch
        %202 = sbr.rel (%p199) target = $region12
      $region11: #{tpu_custom_call.1} parent=5 // pred_region
        %s203 = ssub.s32 %s18, 1
        // Predicated region
        $region13: #{tpu_custom_call.1} parent=11 // pred_check
          %p204 = pneg %p79
        $region14: #{tpu_custom_call.1} parent=11 // pred_check_branch
          %206 = sbr.rel (%p204) target = $region16
        $region15: #{tpu_custom_call.1} parent=11 // pred_region
          _
        $region16: #{tpu_custom_call.1} parent=11 // pred_fallthru
          _
        // Predicated region
        $region17: #{tpu_custom_call.1} parent=11 // pred_check
          %p207 = pneg %p100
        $region18: #{tpu_custom_call.1} parent=11 // pred_check_branch
          %209 = sbr.rel (%p207) target = $region20
        $region19: #{tpu_custom_call.1} parent=11 // pred_region
          _
        $region20: #{tpu_custom_call.1} parent=11 // pred_fallthru
          _
        // Predicated region
        $region21: #{tpu_custom_call.1} parent=11 // pred_check
          %p210 = pneg %p121
        $region22: #{tpu_custom_call.1} parent=11 // pred_check_branch
          %212 = sbr.rel (%p210) target = $region24
        $region23: #{tpu_custom_call.1} parent=11 // pred_region
          _
        $region24: #{tpu_custom_call.1} parent=11 // pred_fallthru
          _
        // Predicated region
        $region25: #{tpu_custom_call.1} parent=11 // pred_check
          %p213 = pneg %p142
        $region26: #{tpu_custom_call.1} parent=11 // pred_check_branch
          %215 = sbr.rel (%p213) target = $region28
        $region27: #{tpu_custom_call.1} parent=11 // pred_region
          %s217 = ssub.s32 16, 16
          %218 = vsyncadd [#allocation7], %s217
          %s220 = sshll.u32 %s4, 4
          %s221 = int_to_ptr.vmem [resolvable:$true] %s220
          %223 = dma.vmem_to_smem %s221, 16, [#allocation8], [#allocation7]
        $region28: #{tpu_custom_call.1} parent=11 // pred_fallthru
          _
        // Predicated region
        $region29: #{tpu_custom_call.1} parent=11 // pred_check
          %p224 = pneg %p163
        $region30: #{tpu_custom_call.1} parent=11 // pred_check_branch
          %226 = sbr.rel (%p224) target = $region32
        $region31: #{tpu_custom_call.1} parent=11 // pred_region
          _
        $region32: #{tpu_custom_call.1} parent=11 // pred_fallthru
          _
      $region12: #{tpu_custom_call.1} parent=5 // pred_fallthru
        _
      %p227 = scmp.lt.s32.totalorder %s18, 4
      // Predicated region
      $region33: #{tpu_custom_call.1} parent=5 // pred_check
        %p228 = pneg %p227
      $region34: #{tpu_custom_call.1} parent=5 // pred_check_branch
        %230 = sbr.rel (%p228) target = $region36
      $region35: #{tpu_custom_call.1} parent=5 // pred_region
        // Predicated region
        $region37: #{tpu_custom_call.1} parent=35 // pred_check
          %p231 = pneg %p52
        $region38: #{tpu_custom_call.1} parent=35 // pred_check_branch
          %233 = sbr.rel (%p231) target = $region40
        $region39: #{tpu_custom_call.1} parent=35 // pred_region
          %s234 = sand.u32 %s42, 1
          %s235 = scalar_lea.sflag [#allocation5], %s234
          %s236 = sand.u32 %s42, 1
          %s237 = smul.addr %s236, 2
          %s238 = scalar_lea.vmem [#allocation4], %s237
          %s240 = ssub.s32 32, 32
          %241 = vsyncadd %s235, %s240
          %s242 = sadd.s32 %s25, %s26
          %s243 = smul.addr %s242, 32
          %s244 = scalar_lea.hbm %s0, %s243
          %s246 = sshll.u32 %s238, 4
          %s247 = int_to_ptr.vmem [resolvable:$true] %s246
          %249 = dma.hbm_to_vmem [thread:$0]  %s244, 32, %s247, %s235
        $region40: #{tpu_custom_call.1} parent=35 // pred_fallthru
          _
      $region36: #{tpu_custom_call.1} parent=5 // pred_fallthru
        _
      %p250 = scmp.le.s32.totalorder 1, %s18
      %p251 = scmp.lt.s32.totalorder %s18, 5
      %p252 = pnand %p250, %p251
      %p253 = pneg %p252
      // Predicated region
      $region41: #{tpu_custom_call.1} parent=5 // pred_check
        _
      $region42: #{tpu_custom_call.1} parent=5 // pred_check_branch
        %255 = sbr.rel (%p252) target = $region44
      $region43: #{tpu_custom_call.1} parent=5 // pred_region
        %s256 = ssub.s32 %s18, 1
        %s257 = sand.u32 %s45, 1
        %s258 = scalar_lea.sflag [#allocation5], %s257
        %s259 = sand.u32 %s45, 1
        %s260 = smul.addr %s259, 2
        %s261 = scalar_lea.vmem [#allocation4], %s260
        // Predicated region
        $region45: #{tpu_custom_call.1} parent=43 // pred_check
          %p262 = pneg %p58
        $region46: #{tpu_custom_call.1} parent=43 // pred_check_branch
          %264 = sbr.rel (%p262) target = $region48
        $region47: #{tpu_custom_call.1} parent=43 // pred_region
          %265 = dma.done %s258, 32
        $region48: #{tpu_custom_call.1} parent=43 // pred_fallthru
          _
        // Predicated region
        $region49: #{tpu_custom_call.1} parent=43 // pred_check
          %p266 = pneg %p142
        $region50: #{tpu_custom_call.1} parent=43 // pred_check_branch
          %268 = sbr.rel (%p266) target = $region52
        $region51: #{tpu_custom_call.1} parent=43 // pred_region
          %269 = dma.done [#allocation7], 16
        $region52: #{tpu_custom_call.1} parent=43 // pred_fallthru
          _
        %270 = sfence
        %s271 = sand.u32 %s45, 1
        %s272 = scalar_lea.sflag [#allocation5], %s271
        %s273 = sand.u32 %s45, 1
        %s274 = smul.addr %s273, 2
        %s275 = scalar_lea.vmem [#allocation4], %s274
        %p276 = pneg %p58
        %p277 = pneg %p55
        %p278 = pneg %p79
        %p279 = pneg %p76
        %p280 = pneg %p100
        %p281 = pneg %p97
        %p282 = pneg %p121
        %p283 = pneg %p118
        %p284 = pneg %p142
        %p285 = pneg %p139
        %p286 = pneg %p163
        %p287 = pneg %p160
        %p288 = pneg %p189
        %p289 = pneg %p186
        %p290 = scmp.eq.s32.totalorder %s28, 0
        // Predicated region
        $region53: #{tpu_custom_call.1} parent=43 // pred_check
          %p291 = pneg %p290
        $region54: #{tpu_custom_call.1} parent=43 // pred_check_branch
          %293 = sbr.rel (%p291) target = $region56
        $region55: #{tpu_custom_call.1} parent=43 // pred_region
          %vm294 = vcmask 64512
          %295 = vst.msk [vmem:[#allocation2] sm:$0xff] %vm294, 0.0
          %296 = vst.msk [vmem:[#allocation2 + $0x8] sm:$0xff] %vm294, 0.0
        $region56: #{tpu_custom_call.1} parent=43 // pred_fallthru
          _
        %v297 = vld [vmem:[%s261] sm:$0x3]
        %v298 = vlaneseq
        %v299 = vshrl.u32 %v298, 7
        %v300 = vsub.s32 0, %v299
        %v301 = vrot.slane %v297, %v300
        %303 = vbcast.lane.b32.xlu0 %v301, 256
        %v304 = vpop.permute.xlu0 %303
        %v305 = vlaneseq
        %v306 = vshrl.u32 %v305, 7
        %v307 = vsub.s32 1, %v306
        %v308 = vrot.slane %v297, %v307
        %310 = vbcast.lane.b32.xlu0 %v308, 256
        %v311 = vpop.permute.xlu0 %310
        %v312 = vld [vmem:[%s1] sm:$0x1]
        %v314 = vlaneseq
        %v315 = vshrl.u32 %v314, 7
        %v316 = vsub.s32 0, %v315
        %v317 = vrot.slane %v312, %v316
        %v319 = vmul.f32 %v304, %v317
        %v320 = vmul.f32 %v311, %v317
        %v321 = vld [vmem:[%s2] sm:$0x1]
        %v323 = vlaneseq
        %v324 = vshrl.u32 %v323, 7
        %v325 = vsub.s32 0, %v324
        %v326 = vrot.slane %v321, %v325
        %v328 = vadd.f32 %v319, %v326
        %v329 = vadd.f32 %v320, %v326
        %v330 = vand.u32 2147483647, %v328
        %vm331 = vcmp.le.f32.partialorder %v330, 0.7853982
        %vm332 = vcmp.lt.s32.totalorder %v328, 0
        %v333 = vand.u32 %v328, 2139095040
        %v334 = vshrl.u32 %v333, 23
        %v335 = vsub.s32 %v334, 127
        %v336 = vand.u32 2147483647, %v328
        %v337 = vand.u32 %v336, 8388607
        %v338 = vor.u32 %v337, 8388608
        %v339 = vsub.s32 0, %v338
        %v340 = vadd.s32 %v335, 1
        %vm341 = vcmp.gt.s32.totalorder %v340, 0
        %v342 = vsel %vm341, %v340, 0
        %v343 = vshrl.u32 %v342, 5
        %v344 = vand.u32 %v342, 31
        %v345 = vsub.s32 32, %v344
        %v346 = vshrl.u32 683565275, %v345
        %v347 = vshll.u32 683565275, %v344
        %v348 = vshrl.u32 2475754826, %v345
        %v349 = vor.u32 %v347, %v348
        %v350 = vshll.u32 2475754826, %v344
        %v351 = vshrl.u32 2131351028, %v345
        %v352 = vor.u32 %v350, %v351
        %v353 = vshll.u32 2131351028, %v344
        %v354 = vshrl.u32 2102212464, %v345
        %v355 = vor.u32 %v353, %v354
        %v356 = vshll.u32 2102212464, %v344
        %v357 = vshrl.u32 920167782, %v345
        %v358 = vor.u32 %v356, %v357
        %v359 = vshll.u32 920167782, %v344
        %v360 = vshrl.u32 1326507024, %v345
        %v361 = vor.u32 %v359, %v360
        %vm362 = vcmp.lt.s32.totalorder %v343, 1
        %vm363 = vcmp.lt.s32.totalorder %v343, 2
        %vm364 = vcmp.lt.s32.totalorder %v343, 3
        %vm365 = vcmp.lt.s32.totalorder %v343, 4
        %v366 = vsel %vm362, %v346, %v349
        %v367 = vsel %vm365, %v355, 2102212464
        %v368 = vsel %vm364, %v352, %v367
        %v369 = vsel %vm363, %v366, %v368
        %v370 = vsel %vm362, %v349, %v352
        %v371 = vsel %vm365, %v358, 920167782
        %v372 = vsel %vm364, %v355, %v371
        %v373 = vsel %vm363, %v370, %v372
        %v374 = vsel %vm362, %v352, %v355
        %v375 = vsel %vm365, %v361, 1326507024
        %v376 = vsel %vm364, %v358, %v375
        %v377 = vsel %vm363, %v374, %v376
        %v378 = vshll.u32 %v338, 8
        %v379 = vmul.u32.u64.compose %v378, %v377
        %v380 = vextract.low.u32 %v379
        %v381 = vextract.high.u32 %v379
        %v382 = vmul.u32.u64.compose %v378, %v373
        %v383 = vextract.low.u32 %v382
        %v384 = vextract.high.u32 %v382
        %v385 = vmul.u32 %v378, %v369
        %v386 = vadd.s32 %v381, %v383
        %vm387 = vc.u32 %v381, %v383
        %v388 = vadd.s32 %v384, 1
        %v389 = vsel %vm387, %v388, %v384
        %v390 = vadd.s32 %v385, %v389
        %v391 = vadd.s32 %v390, 536870912
        %v392 = vshrl.u32 %v391, 30
        %v393 = vshll.u32 %v392, 30
        %v394 = vsub.s32 %v390, %v393
        %vm395 = vcmp.lt.s32.totalorder %v394, 0
        %v396 = vsub.s32 0, %v394
        %v397 = vsel %vm395, %v396, %v394
        %v398 = vclz %v397
        %v399 = vsub.s32 %v398, 2
        %vm400 = vcmp.gt.s32.totalorder 0, %v399
        %v401 = vsel %vm400, 0, %v399
        %v402 = vsub.s32 32, %v401
        %v403 = vshll.u32 %v394, %v401
        %v404 = vshrl.u32 %v386, %v402
        %v405 = vor.u32 %v403, %v404
        %v406 = vsub.s32 4294967266, %v401
        %v407 = vadd.s32 %v406, 127
        %v408 = vshll.u32 %v407, 23
        %v409 = vor.u32 4788187, %v408
        %v410 = vand.u32 2147483647, %v409
        %v412 = vcvt.s32.f32 %v405
        %v413 = vmul.f32 %v412, %v410
        %v414 = vxor.u32 %v413, 2147483648
        %v415 = vsel %vm332, %v414, %v413
        %v416 = vsub.s32 4, %v392
        %v417 = vsel %vm332, %v416, %v392
        %v418 = vsel %vm331, %v328, %v415
        %v419 = vsel %vm331, 0, %v417
        %v420 = vcosq.f32.pop %v418
        %v421 = vsinq.f32.pop %v418
        %vm422 = vweird.f32 %v328
        %v423 = vadd.s32 %v419, 3
        %v424 = vand.u32 %v423, 3
        %vm425 = vcmp.lt.s32.totalorder %v424, 2
        %vm426 = vcmp.eq.s32.totalorder %v424, 0
        %v427 = vxor.u32 %v421, 2147483648
        %v428 = vsel %vm426, %v420, %v427
        %vm429 = vcmp.eq.s32.totalorder %v424, 2
        %v430 = vxor.u32 %v420, 2147483648
        %v431 = vsel %vm429, %v430, %v421
        %v432 = vsel %vm425, %v428, %v431
        %v433 = vsel %vm422, nan, %v432
        %v434 = vand.u32 2147483647, %v329
        %vm435 = vcmp.le.f32.partialorder %v434, 0.7853982
        %vm436 = vcmp.lt.s32.totalorder %v329, 0
        %v437 = vand.u32 %v329, 2139095040
        %v438 = vshrl.u32 %v437, 23
        %v439 = vsub.s32 %v438, 127
        %v440 = vand.u32 2147483647, %v329
        %v441 = vand.u32 %v440, 8388607
        %v442 = vor.u32 %v441, 8388608
        %v443 = vsub.s32 0, %v442
        %v444 = vadd.s32 %v439, 1
        %vm445 = vcmp.gt.s32.totalorder %v444, 0
        %v446 = vsel %vm445, %v444, 0
        %v447 = vshrl.u32 %v446, 5
        %v448 = vand.u32 %v446, 31
        %v449 = vsub.s32 32, %v448
        %v450 = vshrl.u32 683565275, %v449
        %v451 = vshll.u32 683565275, %v448
        %v452 = vshrl.u32 2475754826, %v449
        %v453 = vor.u32 %v451, %v452
        %v454 = vshll.u32 2475754826, %v448
        %v455 = vshrl.u32 2131351028, %v449
        %v456 = vor.u32 %v454, %v455
        %v457 = vshll.u32 2131351028, %v448
        %v458 = vshrl.u32 2102212464, %v449
        %v459 = vor.u32 %v457, %v458
        %v460 = vshll.u32 2102212464, %v448
        %v461 = vshrl.u32 920167782, %v449
        %v462 = vor.u32 %v460, %v461
        %v463 = vshll.u32 920167782, %v448
        %v464 = vshrl.u32 1326507024, %v449
        %v465 = vor.u32 %v463, %v464
        %vm466 = vcmp.lt.s32.totalorder %v447, 1
        %vm467 = vcmp.lt.s32.totalorder %v447, 2
        %vm468 = vcmp.lt.s32.totalorder %v447, 3
        %vm469 = vcmp.lt.s32.totalorder %v447, 4
        %v470 = vsel %vm466, %v450, %v453
        %v471 = vsel %vm469, %v459, 2102212464
        %v472 = vsel %vm468, %v456, %v471
        %v473 = vsel %vm467, %v470, %v472
        %v474 = vsel %vm466, %v453, %v456
        %v475 = vsel %vm469, %v462, 920167782
        %v476 = vsel %vm468, %v459, %v475
        %v477 = vsel %vm467, %v474, %v476
        %v478 = vsel %vm466, %v456, %v459
        %v479 = vsel %vm469, %v465, 1326507024
        %v480 = vsel %vm468, %v462, %v479
        %v481 = vsel %vm467, %v478, %v480
        %v482 = vshll.u32 %v442, 8
        %v483 = vmul.u32.u64.compose %v482, %v481
        %v484 = vextract.low.u32 %v483
        %v485 = vextract.high.u32 %v483
        %v486 = vmul.u32.u64.compose %v482, %v477
        %v487 = vextract.low.u32 %v486
        %v488 = vextract.high.u32 %v486
        %v489 = vmul.u32 %v482, %v473
        %v490 = vadd.s32 %v485, %v487
        %vm491 = vc.u32 %v485, %v487
        %v492 = vadd.s32 %v488, 1
        %v493 = vsel %vm491, %v492, %v488
        %v494 = vadd.s32 %v489, %v493
        %v495 = vadd.s32 %v494, 536870912
        %v496 = vshrl.u32 %v495, 30
        %v497 = vshll.u32 %v496, 30
        %v498 = vsub.s32 %v494, %v497
        %vm499 = vcmp.lt.s32.totalorder %v498, 0
        %v500 = vsub.s32 0, %v498
        %v501 = vsel %vm499, %v500, %v498
        %v502 = vclz %v501
        %v503 = vsub.s32 %v502, 2
        %vm504 = vcmp.gt.s32.totalorder 0, %v503
        %v505 = vsel %vm504, 0, %v503
        %v506 = vsub.s32 32, %v505
        %v507 = vshll.u32 %v498, %v505
        %v508 = vshrl.u32 %v490, %v506
        %v509 = vor.u32 %v507, %v508
        %v510 = vsub.s32 4294967266, %v505
        %v511 = vadd.s32 %v510, 127
        %v512 = vshll.u32 %v511, 23
        %v513 = vor.u32 4788187, %v512
        %v514 = vand.u32 2147483647, %v513
        %v516 = vcvt.s32.f32 %v509
        %v517 = vmul.f32 %v516, %v514
        %v518 = vxor.u32 %v517, 2147483648
        %v519 = vsel %vm436, %v518, %v517
        %v520 = vsub.s32 4, %v496
        %v521 = vsel %vm436, %v520, %v496
        %v522 = vsel %vm435, %v329, %v519
        %v523 = vsel %vm435, 0, %v521
        %v524 = vcosq.f32.pop %v522
        %v525 = vsinq.f32.pop %v522
        %vm526 = vweird.f32 %v329
        %v527 = vadd.s32 %v523, 3
        %v528 = vand.u32 %v527, 3
        %vm529 = vcmp.lt.s32.totalorder %v528, 2
        %vm530 = vcmp.eq.s32.totalorder %v528, 0
        %v531 = vxor.u32 %v525, 2147483648
        %v532 = vsel %vm530, %v524, %v531
        %vm533 = vcmp.eq.s32.totalorder %v528, 2
        %v534 = vxor.u32 %v524, 2147483648
        %v535 = vsel %vm533, %v534, %v525
        %v536 = vsel %vm529, %v532, %v535
        %v537 = vsel %vm526, nan, %v536
        %v538 = vld [vmem:[%s3] sm:$0x1]
        %v540 = vlaneseq
        %v541 = vshrl.u32 %v540, 7
        %v542 = vsub.s32 0, %v541
        %v543 = vrot.slane %v538, %v542
        %v545 = vmul.f32 %v433, %v543
        %v546 = vmul.f32 %v537, %v543
        %549 = vrot.lane.b32.xlu0 %v545, 120
        %v550 = vpop.permute.xlu0 %549
        %551 = vrot.lane.b32.xlu0 %v546, 120
        %v552 = vpop.permute.xlu0 %551
        %v555 = vadd.f32 %v545, %v550
        %v556 = vadd.f32 %v546, %v552
        %557 = vrot.lane.b32.xlu0 %v545, 112
        %v558 = vpop.permute.xlu0 %557
        %559 = vrot.lane.b32.xlu0 %v546, 112
        %v560 = vpop.permute.xlu0 %559
        %v563 = vadd.f32 %v555, %v558
        %v564 = vadd.f32 %v556, %v560
        %565 = vrot.lane.b32.xlu0 %v545, 104
        %v566 = vpop.permute.xlu0 %565
        %567 = vrot.lane.b32.xlu0 %v546, 104
        %v568 = vpop.permute.xlu0 %567
        %v571 = vadd.f32 %v563, %v566
        %v572 = vadd.f32 %v564, %v568
        %573 = vrot.lane.b32.xlu0 %v545, 96
        %v574 = vpop.permute.xlu0 %573
        %575 = vrot.lane.b32.xlu0 %v546, 96
        %v576 = vpop.permute.xlu0 %575
        %v579 = vadd.f32 %v571, %v574
        %v580 = vadd.f32 %v572, %v576
        %581 = vrot.lane.b32.xlu0 %v545, 88
        %v582 = vpop.permute.xlu0 %581
        %583 = vrot.lane.b32.xlu0 %v546, 88
        %v584 = vpop.permute.xlu0 %583
        %v587 = vadd.f32 %v579, %v582
        %v588 = vadd.f32 %v580, %v584
        %589 = vrot.lane.b32.xlu0 %v545, 80
        %v590 = vpop.permute.xlu0 %589
        %591 = vrot.lane.b32.xlu0 %v546, 80
        %v592 = vpop.permute.xlu0 %591
        %v595 = vadd.f32 %v587, %v590
        %v596 = vadd.f32 %v588, %v592
        %597 = vrot.lane.b32.xlu0 %v545, 72
        %v598 = vpop.permute.xlu0 %597
        %599 = vrot.lane.b32.xlu0 %v546, 72
        %v600 = vpop.permute.xlu0 %599
        %v603 = vadd.f32 %v595, %v598
        %v604 = vadd.f32 %v596, %v600
        %605 = vrot.lane.b32.xlu0 %v545, 64
        %v606 = vpop.permute.xlu0 %605
        %607 = vrot.lane.b32.xlu0 %v546, 64
        %v608 = vpop.permute.xlu0 %607
        %v611 = vadd.f32 %v603, %v606
        %v612 = vadd.f32 %v604, %v608
        %613 = vrot.lane.b32.xlu0 %v545, 56
        %v614 = vpop.permute.xlu0 %613
        %615 = vrot.lane.b32.xlu0 %v546, 56
        %v616 = vpop.permute.xlu0 %615
        %v619 = vadd.f32 %v611, %v614
        %v620 = vadd.f32 %v612, %v616
        %621 = vrot.lane.b32.xlu0 %v545, 48
        %v622 = vpop.permute.xlu0 %621
        %623 = vrot.lane.b32.xlu0 %v546, 48
        %v624 = vpop.permute.xlu0 %623
        %v627 = vadd.f32 %v619, %v622
        %v628 = vadd.f32 %v620, %v624
        %629 = vrot.lane.b32.xlu0 %v545, 40
        %v630 = vpop.permute.xlu0 %629
        %631 = vrot.lane.b32.xlu0 %v546, 40
        %v632 = vpop.permute.xlu0 %631
        %v635 = vadd.f32 %v627, %v630
        %v636 = vadd.f32 %v628, %v632
        %637 = vrot.lane.b32.xlu0 %v545, 32
        %v638 = vpop.permute.xlu0 %637
        %639 = vrot.lane.b32.xlu0 %v546, 32
        %v640 = vpop.permute.xlu0 %639
        %v643 = vadd.f32 %v635, %v638
        %v644 = vadd.f32 %v636, %v640
        %645 = vrot.lane.b32.xlu0 %v545, 24
        %v646 = vpop.permute.xlu0 %645
        %647 = vrot.lane.b32.xlu0 %v546, 24
        %v648 = vpop.permute.xlu0 %647
        %v651 = vadd.f32 %v643, %v646
        %v652 = vadd.f32 %v644, %v648
        %653 = vrot.lane.b32.xlu0 %v545, 16
        %v654 = vpop.permute.xlu0 %653
        %655 = vrot.lane.b32.xlu0 %v546, 16
        %v656 = vpop.permute.xlu0 %655
        %v659 = vadd.f32 %v651, %v654
        %v660 = vadd.f32 %v652, %v656
        %661 = vrot.lane.b32.xlu0 %v545, 8
        %v662 = vpop.permute.xlu0 %661
        %663 = vrot.lane.b32.xlu0 %v546, 8
        %v664 = vpop.permute.xlu0 %663
        %v667 = vadd.f32 %v659, %v662
        %v668 = vadd.f32 %v660, %v664
        %v669 = vld [vmem:[#allocation2] sm:$0xff]
        %v670 = vld [vmem:[#allocation2 + $0x8] sm:$0xff]
        %s671 = sld [smem:[#allocation8 + %s28]]
        %v672 = vstv %s671
        %v673 = vmul.f32 %v672, %v667
        %v674 = vmul.f32 %v672, %v668
        %v675 = vadd.f32 %v669, %v673
        %v676 = vadd.f32 %v670, %v674
        %vm677 = vcmask 64512
        %678 = vst.msk [vmem:[#allocation2] sm:$0xff] %vm677, %v675
        %679 = vst.msk [vmem:[#allocation2 + $0x8] sm:$0xff] %vm677, %v676
        %p680 = scmp.eq.s32.totalorder %s28, 3
        // Predicated region
        $region57: #{tpu_custom_call.1} parent=43 // pred_check
          %p681 = pneg %p680
        $region58: #{tpu_custom_call.1} parent=43 // pred_check_branch
          %683 = sbr.rel (%p681) target = $region60
        $region59: #{tpu_custom_call.1} parent=43 // pred_region
          %v684 = vld [vmem:[#allocation2] sm:$0xff]
          %v685 = vld [vmem:[#allocation2 + $0x8] sm:$0xff]
          %s686 = sld [smem:[#allocation3]]
          %v687 = vstv %s686
          %v688 = vadd.f32 %v684, %v687
          %v689 = vadd.f32 %v685, %v687
          %690 = vxpose.xlu0.b32.start [1/16] %v688, 128
          %691 = vxpose.xlu0.b32.cont [2/16] 0.0, 128
          %692 = vxpose.xlu0.b32.cont [3/16] 0.0, 128
          %693 = vxpose.xlu0.b32.cont [4/16] 0.0, 128
          %694 = vxpose.xlu0.b32.cont [5/16] 0.0, 128
          %695 = vxpose.xlu0.b32.cont [6/16] 0.0, 128
          %696 = vxpose.xlu0.b32.cont [7/16] 0.0, 128
          %697 = vxpose.xlu0.b32.cont [8/16] 0.0, 128
          %698 = vxpose.xlu0.b32.cont [9/16] 0.0, 128
          %699 = vxpose.xlu0.b32.cont [10/16] 0.0, 128
          %700 = vxpose.xlu0.b32.cont [11/16] 0.0, 128
          %701 = vxpose.xlu0.b32.cont [12/16] 0.0, 128
          %702 = vxpose.xlu0.b32.cont [13/16] 0.0, 128
          %703 = vxpose.xlu0.b32.cont [14/16] 0.0, 128
          %704 = vxpose.xlu0.b32.cont [15/16] 0.0, 128
          %705 = vxpose.xlu0.b32.end [16/16] 0.0, 128
          %v706 = vpop.trf.xlu0
          %v707 = vpop.trf.xlu0
          %v708 = vpop.trf.xlu0
          %v709 = vpop.trf.xlu0
          %v710 = vpop.trf.xlu0
          %v711 = vpop.trf.xlu0
          %v712 = vpop.trf.xlu0
          %v713 = vpop.trf.xlu0
          %v714 = vpop.trf.xlu0
          %v715 = vpop.trf.xlu0
          %v716 = vpop.trf.xlu0
          %v717 = vpop.trf.xlu0
          %v718 = vpop.trf.xlu0
          %v719 = vpop.trf.xlu0
          %v720 = vpop.trf.xlu0
          %v721 = vpop.trf.xlu0
          %722 = vxpose.xlu0.b32.start [1/16] %v689, 128
          %723 = vxpose.xlu0.b32.cont [2/16] 0.0, 128
          %724 = vxpose.xlu0.b32.cont [3/16] 0.0, 128
          %725 = vxpose.xlu0.b32.cont [4/16] 0.0, 128
          %726 = vxpose.xlu0.b32.cont [5/16] 0.0, 128
          %727 = vxpose.xlu0.b32.cont [6/16] 0.0, 128
          %728 = vxpose.xlu0.b32.cont [7/16] 0.0, 128
          %729 = vxpose.xlu0.b32.cont [8/16] 0.0, 128
          %730 = vxpose.xlu0.b32.cont [9/16] 0.0, 128
          %731 = vxpose.xlu0.b32.cont [10/16] 0.0, 128
          %732 = vxpose.xlu0.b32.cont [11/16] 0.0, 128
          %733 = vxpose.xlu0.b32.cont [12/16] 0.0, 128
          %734 = vxpose.xlu0.b32.cont [13/16] 0.0, 128
          %735 = vxpose.xlu0.b32.cont [14/16] 0.0, 128
          %736 = vxpose.xlu0.b32.cont [15/16] 0.0, 128
          %737 = vxpose.xlu0.b32.end [16/16] 0.0, 128
          %v738 = vpop.trf.xlu0
          %v739 = vpop.trf.xlu0
          %v740 = vpop.trf.xlu0
          %v741 = vpop.trf.xlu0
          %v742 = vpop.trf.xlu0
          %v743 = vpop.trf.xlu0
          %v744 = vpop.trf.xlu0
          %v745 = vpop.trf.xlu0
          %v746 = vpop.trf.xlu0
          %v747 = vpop.trf.xlu0
          %v748 = vpop.trf.xlu0
          %v749 = vpop.trf.xlu0
          %v750 = vpop.trf.xlu0
          %v751 = vpop.trf.xlu0
          %v752 = vpop.trf.xlu0
          %v753 = vpop.trf.xlu0
          %v754 = vcombine.high %v706, 0.0
          %v756 = vunpack.c.l.s4 1983009808
          %v757 = vunpack.c.0.s8 %v756
          %v758 = vlaneseq
          %v759 = vshrl.u32 %v758, 7
          %v760 = vsub.s32 %v757, %v759
          %v761 = vrot.slane %v706, %v760
          %v763 = vunpack.c.l.s4 1983009808
          %v764 = vunpack.c.0.s8 %v763
          %v765 = vlaneseq
          %v766 = vshrl.u32 %v765, 7
          %v767 = vsub.s32 %v764, %v766
          %v768 = vrot.slane %v754, %v767
          %v769 = vcombine.high %v738, 0.0
          %v771 = vunpack.c.l.s4 1983009808
          %v772 = vunpack.c.0.s8 %v771
          %v773 = vlaneseq
          %v774 = vshrl.u32 %v773, 7
          %v775 = vsub.s32 %v772, %v774
          %v776 = vrot.slane %v738, %v775
          %v778 = vunpack.c.l.s4 1983009808
          %v779 = vunpack.c.0.s8 %v778
          %v780 = vlaneseq
          %v781 = vshrl.u32 %v780, 7
          %v782 = vsub.s32 %v779, %v781
          %v783 = vrot.slane %v769, %v782
          %v784 = vcombine.low %v761, %v776
          %v785 = vcombine.high %v761, %v776
          %v787 = vunpack.c.l.s4 1934713408
          %v788 = vunpack.c.0.s8 %v787
          %v789 = vlaneseq
          %v790 = vshrl.u32 %v789, 7
          %v791 = vsub.s32 %v788, %v790
          %v792 = vrot.slane %v784, %v791
          %v794 = vunpack.c.l.s4 1934713408
          %v795 = vunpack.c.0.s8 %v794
          %v796 = vlaneseq
          %v797 = vshrl.u32 %v796, 7
          %v798 = vsub.s32 %v795, %v797
          %v799 = vrot.slane %v785, %v798
          %v800 = vcombine.low %v768, %v783
          %v801 = vcombine.high %v768, %v783
          %v803 = vunpack.c.l.s4 1934713408
          %v804 = vunpack.c.0.s8 %v803
          %v805 = vlaneseq
          %v806 = vshrl.u32 %v805, 7
          %v807 = vsub.s32 %v804, %v806
          %v808 = vrot.slane %v800, %v807
          %v810 = vunpack.c.l.s4 1934713408
          %v811 = vunpack.c.0.s8 %v810
          %v812 = vlaneseq
          %v813 = vshrl.u32 %v812, 7
          %v814 = vsub.s32 %v811, %v813
          %v815 = vrot.slane %v801, %v814
          %v816 = vcombine.high %v792, 0.0
          %v817 = vcombine.high %v799, 0.0
          %v818 = vcombine.high %v808, 0.0
          %v819 = vcombine.high %v815, 0.0
          %821 = vrot.lane.b32.xlu0 %v816, 8
          %v822 = vpop.permute.xlu0 %821
          %825 = vrot.lane.b32.xlu0 %v799, 16
          %v826 = vpop.permute.xlu0 %825
          %829 = vrot.lane.b32.xlu0 %v817, 24
          %v830 = vpop.permute.xlu0 %829
          %833 = vrot.lane.b32.xlu0 %v808, 32
          %v834 = vpop.permute.xlu0 %833
          %837 = vrot.lane.b32.xlu0 %v818, 40
          %v838 = vpop.permute.xlu0 %837
          %841 = vrot.lane.b32.xlu0 %v815, 48
          %v842 = vpop.permute.xlu0 %841
          %845 = vrot.lane.b32.xlu0 %v819, 56
          %v846 = vpop.permute.xlu0 %845
          %v848 = vsel %vm677, %v792, %v822
          %vm849 = vcmask 130048
          %v850 = vsel %vm849, %v848, %v826
          %vm851 = vcmask 195584
          %v852 = vsel %vm851, %v850, %v830
          %vm853 = vcmask 261120
          %v854 = vsel %vm853, %v852, %v834
          %vm855 = vcmask 326656
          %v856 = vsel %vm855, %v854, %v838
          %vm857 = vcmask 392192
          %v858 = vsel %vm857, %v856, %v842
          %vm859 = vcmask 457728
          %v860 = vsel %vm859, %v858, %v846
          %vm861 = vcmask 517120
          %862 = vst.msk [vmem:[#allocation9] sm:$0x3] %vm861, %v860
        $region60: #{tpu_custom_call.1} parent=43 // pred_fallthru
          _
        // Predicated region
        $region61: #{tpu_custom_call.1} parent=43 // pred_check
          %p863 = pneg %p186
        $region62: #{tpu_custom_call.1} parent=43 // pred_check_branch
          %865 = sbr.rel (%p863) target = $region64
        $region63: #{tpu_custom_call.1} parent=43 // pred_region
          %s867 = ssub.s32 32, 32
          %868 = vsyncadd [#allocation6], %s867
          %s869 = smul.addr %s27, 32
          %s870 = scalar_lea.hbm %s6, %s869
          %s872 = sshll.u32 [#allocation9], 4
          %s873 = int_to_ptr.vmem [resolvable:$true] %s872
          %875 = dma.vmem_to_hbm [thread:$0]  %s873, 32, %s870, [#allocation6]
        $region64: #{tpu_custom_call.1} parent=43 // pred_fallthru
          _
        // Predicated region
        $region65: #{tpu_custom_call.1} parent=43 // pred_check
          %p876 = pneg %p186
        $region66: #{tpu_custom_call.1} parent=43 // pred_check_branch
          %878 = sbr.rel (%p876) target = $region68
        $region67: #{tpu_custom_call.1} parent=43 // pred_region
          %879 = dma.done [#allocation6], 32
        $region68: #{tpu_custom_call.1} parent=43 // pred_fallthru
          _
      $region44: #{tpu_custom_call.1} parent=5 // pred_fallthru
        _
      %p880 = scmp.le.s32.totalorder 2, %s18
      // Predicated region
      $region69: #{tpu_custom_call.1} parent=5 // pred_check
        %p881 = pneg %p880
      $region70: #{tpu_custom_call.1} parent=5 // pred_check_branch
        %883 = sbr.rel (%p881) target = $region72
      $region71: #{tpu_custom_call.1} parent=5 // pred_region
        %s884 = ssub.s32 %s18, 2
      $region72: #{tpu_custom_call.1} parent=5 // pred_fallthru
        _
    $region6: #{tpu_custom_call.1} parent=1 // loop_footer
      %s22 = sadd.s32 1, %s18
    $region7: #{tpu_custom_call.1} parent=1 // loop_footer_branch
      %17 = sbr.rel target = $region3
    $region8: #{tpu_custom_call.1} parent=1 // loop_exit
      _
    %885 = vsyncpa [#allocation5], 1
    %s886 = scalar_lea.sflag [#allocation5], 1
    %887 = vsyncpa %s886, 1
    %888 = vsyncpa [#allocation6], 1
    %s889 = scalar_lea.sflag [#allocation6], 1
    %890 = vsyncpa %s889, 1
    %891 = vsyncpa [#allocation7], 1
    %s892 = scalar_lea.sflag [#allocation7], 1
    %893 = vsyncpa %s892, 1

</llo_original>
